<compile_context>
chip_gen: v7x
topology: tpu7x:2x2x1
jax: 0.10.0
libtpu: 0.0.40
codegen_flags: <defaults>
</compile_context>

<pallas_src>
import math

import jax
import jax.numpy as jnp
from jax.experimental import pallas as pl
from jax.experimental.pallas import tpu as pltpu


def _eca_kernel(wmat_ref, x_ref, o_ref):
    # wmat_ref: (C, C) f32 transposed band matrix (same block every grid step,
    #           so it stays resident in VMEM after the first DMA).
    # x_ref / o_ref: (BB, C, HW) block — BB batch elements per grid step.
    x = x_ref[...]                                                   # (BB, C, HW)

    # Global average pool over spatial positions (lane-axis reduce), f32 accum.
    pooled = jnp.mean(x.astype(jnp.float32), axis=2)                 # (BB, C)

    # K-tap Conv1d along channels (zero-padded) == band-matrix contraction:
    #   conv[b, c] = sum_d pooled[b, d] * wmat_t[d, c],  wmat_t[d, c] = w[d-c+P]
    conv = jnp.dot(pooled, wmat_ref[...],
                   preferred_element_type=jnp.float32)               # (BB, C)

    # Sigmoid gate; per-channel scale broadcasts across the HW lane axis free.
    scale = jax.nn.sigmoid(conv).astype(x.dtype)[:, :, None]         # (BB, C, 1)
    o_ref[...] = x * scale


def eca_forward(x, conv_w, kernel_size, *, vmem_budget_bytes=16 * 1024 * 1024):
    """x: (B, C, H, W) NCHW; conv_w: (K,) Conv1d weight (in=out=1, no bias)."""
    B, C, H, W = x.shape
    HW = H * W
    P = kernel_size // 2

    # NCHW -> (B, C, H*W) is a pure reshape of a contiguous buffer (no copy).
    x_flat = x.reshape(B, C, HW)

    # Precompute the (transposed) band matrix once (tiny, O(C^2) wrapper work):
    #   wmat_t[d, c] = w[d - c + P]  if 0 <= d - c + P < K  else 0
    # so that  conv = pooled @ wmat_t  matches PyTorch Conv1d with zero padding.
    w = conv_w.astype(jnp.float32)
    d_in = jnp.arange(C)[:, None]
    c_out = jnp.arange(C)[None, :]
    tap = d_in - c_out + P
    wmat_t = jnp.where((tap >= 0) & (tap < kernel_size),
                       w[jnp.clip(tap, 0, kernel_size - 1)],
                       jnp.float32(0.0))                             # (C, C)

    # Batch tile: largest divisor of B whose double-buffered in+out blocks fit
    # the VMEM budget (4 buffers of bb*C*HW each). Amortizes per-step overhead.
    bytes_per_image = C * HW * x.dtype.itemsize
    max_bb = max(1, vmem_budget_bytes // max(1, 4 * bytes_per_image))
    bb = 1
    for cand in range(1, B + 1):
        if B % cand == 0 and cand <= max_bb:
            bb = cand

    out = pl.pallas_call(
        _eca_kernel,
        out_shape=jax.ShapeDtypeStruct((B, C, HW), x.dtype),
        grid_spec=pltpu.PrefetchScalarGridSpec(
            num_scalar_prefetch=0,
            grid=(B // bb,),
            in_specs=[
                # Band matrix: same block every step -> DMA'd once, resident.
                pl.BlockSpec((C, C), lambda b: (0, 0)),
                # bb batch elements per step; lane dim = HW (multiple of 128).
                pl.BlockSpec((bb, C, HW), lambda b: (b, 0, 0)),
            ],
            out_specs=pl.BlockSpec((bb, C, HW), lambda b: (b, 0, 0)),
        ),
        compiler_params=pltpu.CompilerParams(
            dimension_semantics=("parallel",),
        ),
        # NOTE: when the caller can donate x, input_output_aliases={1: 0} lets
        # the rescale write back into x's HBM buffer (skipped here so x stays
        # live for the reference check).
    )(wmat_t, x_flat)

    return out.reshape(B, C, H, W)


if __name__ == "__main__":
    # Module hyper-params (same formula as ECA.__init__)
    B, C, H, W = 2, 16, 16, 16
    gamma, b = 2, 1
    k = int(abs((math.log(C, 2) + b) / gamma))
    kernel_size = k if k % 2 else k + 1        # C=16 -> kernel_size=3, padding=1
    P = kernel_size // 2

    key = jax.random.PRNGKey(0)
    kx, kw = jax.random.split(key)
    x = jax.random.normal(kx, (B, C, H, W), dtype=jnp.float32)
    conv_w = 0.1 * jax.random.normal(kw, (kernel_size,), dtype=jnp.float32)

    out = jax.block_until_ready(eca_forward(x, conv_w, kernel_size))

    # plain-JAX reference for verification
    pooled = jnp.mean(x, axis=(2, 3))                               # (B, C)
    padded = jnp.pad(pooled, ((0, 0), (P, P)))
    conv = sum(conv_w[j] * padded[:, j:j + C] for j in range(kernel_size))
    ref = x * jax.nn.sigmoid(conv)[:, :, None, None]

    assert out.shape == x.shape and out.dtype == x.dtype
    assert jnp.allclose(out, ref, atol=1e-5, rtol=1e-5)
    print("KERNEL_OK")
</pallas_src>

<mosaic_0001>
module attributes {stable_mosaic.version = 11 : i64} {
  func.func @_eca_kernel(%arg0: i32, %arg1: memref<16x16xf32, #tpu.memory_space<vmem>>, %arg2: memref<2x16x256xf32, #tpu.memory_space<vmem>>, %arg3: memref<2x16x256xf32, #tpu.memory_space<vmem>>) attributes {dimension_semantics = [#tpu.dimension_semantics<parallel>], iteration_bounds = array<i64: 1>, scalar_prefetch = 0 : i64, scratch_operands = 0 : i64, tpu.core_type = #tpu.core_type<tc>, window_params = [{pipeline_mode = #tpu.pipeline_mode<synchronous>, transform_indices = @transform_0, window_bounds = array<i64: 16, 16>}, {transform_indices = @transform_1, window_bounds = array<i64: 2, 16, 256>}, {transform_indices = @transform_2, window_bounds = array<i64: 2, 16, 256>}]} {
    %c0 = arith.constant 0 : index
    %c0_0 = arith.constant 0 : index
    %c0_1 = arith.constant 0 : index
    %0 = vector.load %arg2[%c0, %c0_0, %c0_1] : memref<2x16x256xf32, #tpu.memory_space<vmem>>, vector<2x16x256xf32>
    %cst = arith.constant dense<0.000000e+00> : vector<2x16xf32>
    %1 = vector.multi_reduction <add>, %0, %cst [2] : vector<2x16x256xf32> to vector<2x16xf32>
    %cst_2 = arith.constant 2.560000e+02 : f32
    %2 = vector.broadcast %cst_2 : f32 to vector<2x16xf32>
    %3 = arith.divf %1, %2 : vector<2x16xf32>
    %c0_3 = arith.constant 0 : index
    %c0_4 = arith.constant 0 : index
    %4 = vector.load %arg1[%c0_3, %c0_4] : memref<16x16xf32, #tpu.memory_space<vmem>>, vector<16x16xf32>
    %cst_5 = arith.constant dense<0.000000e+00> : vector<2x16xf32>
    %5 = tpu.matmul %3, %4, %cst_5 {dimension_numbers = #tpu.dot_dimension_numbers<[1], [0], [0], [1], [0, 0, 1, 1], [], []>} : vector<2x16xf32>, vector<16x16xf32>, vector<2x16xf32> -> vector<2x16xf32>
    %6 = arith.negf %5 : vector<2x16xf32>
    %7 = math.exp %6 : vector<2x16xf32>
    %cst_6 = arith.constant 1.000000e+00 : f32
    %8 = vector.broadcast %cst_6 : f32 to vector<2x16xf32>
    %9 = arith.addf %8, %7 : vector<2x16xf32>
    %10 = arith.divf %8, %9 : vector<2x16xf32>
    %11 = vector.shape_cast %10 : vector<2x16xf32> to vector<2x16x1xf32>
    %12 = vector.broadcast %11 : vector<2x16x1xf32> to vector<2x16x256xf32>
    %13 = arith.mulf %0, %12 : vector<2x16x256xf32>
    %c0_7 = arith.constant 0 : index
    %c0_8 = arith.constant 0 : index
    %c0_9 = arith.constant 0 : index
    %14 = vector.load %arg3[%c0_7, %c0_8, %c0_9] : memref<2x16x256xf32, #tpu.memory_space<vmem>>, vector<2x16x256xf32>
    tpu.vector_store %arg3[%c0_7, %c0_8, %c0_9], %13 {strides = array<i32>} : memref<2x16x256xf32, #tpu.memory_space<vmem>>, vector<2x16x256xf32>,
    return
  }
  func.func @transform_0(%arg0: i32) -> (i32, i32) {
    %c0_i32 = arith.constant 0 : i32
    %c0_i32_0 = arith.constant 0 : i32
    %c0_i32_1 = arith.constant 0 : i32
    return %c0_i32, %c0_i32_0 : i32, i32
  }
  func.func @transform_1(%arg0: i32) -> (i32, i32, i32) {
    %c0_i32 = arith.constant 0 : i32
    %c0_i32_0 = arith.constant 0 : i32
    %c0_i32_1 = arith.constant 0 : i32
    return %arg0, %c0_i32, %c0_i32_0 : i32, i32, i32
  }
  func.func @transform_2(%arg0: i32) -> (i32, i32, i32) {
    %c0_i32 = arith.constant 0 : i32
    %c0_i32_0 = arith.constant 0 : i32
    %c0_i32_1 = arith.constant 0 : i32
    return %arg0, %c0_i32, %c0_i32_0 : i32, i32, i32
  }
}

</mosaic_0001>

<llo_original>
// kernel: tpu_custom_call.1
$region0: #{tpu_custom_call.1}
  #allocation0 [shape = 'u32[]', space=smem, size = 0x4, offset = 0x4, fixed_abs, tag = 'smem constant byte address 0x4 - core index']
  #allocation1 [shape = 'u32[144,128]{1,0:T(1,128)}', space=vmem, size = 0x12000, scoped, tag = 'internal scratch']
  %s0 = inlined_call_operand.hbm [shape: f32[16,16], index: 0, kind: input, shape index: {}]
  %s1 = inlined_call_operand.hbm [shape: f32[2,16,256], index: 1, kind: input, shape index: {}]
  %s2 = inlined_call_operand.hbm [shape: f32[2,16,256], index: 2, kind: output, shape index: {}]
  %s3 = sld [smem:[#allocation0]]
  $region26: #{tpu_custom_call.1} parent=0
    _
  %s5 = ssub.s32 1, %s3
  %s6 = scalar_select 0, %s5, %s3
  $region1: #{tpu_custom_call.1} parent=0
    #allocation2 [shape = 'u8[8192]{0}', space=vmem, size = 0x2000, scoped, tag = 'input window, operand 0, single buffered']
    #allocation3 [shape = 's32[1]{0}', space=sflag, size = 0x4, scoped, tag = 'scoped memory for tpu_custom_call.1']
    #allocation4 [shape = 's32[1]{0}', space=sflag, size = 0x4, scoped, tag = 'scoped memory for tpu_custom_call.1']
    #allocation5 [shape = 'u8[32768]{0}', space=vmem, size = 0x8000, scoped, tag = 'input window, operand 1, single buffered']
    #allocation6 [shape = 's32[1]{0}', space=sflag, size = 0x4, scoped, tag = 'scoped memory for tpu_custom_call.1']
    #allocation7 [shape = 'u8[32768]{0}', space=vmem, size = 0x8000, scoped, tag = 'output window, operand 0, single buffered']
    %7 = vsyncpa [#allocation3], 0
    %8 = vsyncpa [#allocation6], 0
    %9 = vsyncpa [#allocation4], 0
    // Predicated region
    $region2: #{tpu_custom_call.1} parent=1 // pred_check
      _
    $region3: #{tpu_custom_call.1} parent=1 // pred_check_branch
      %11 = sbr.rel (0) target = $region5
    $region4: #{tpu_custom_call.1} parent=1 // pred_region
      %s13 = ssub.s32 256, 256
      %14 = vsyncadd [#allocation3], %s13
      %s15 = sshll.u32 [#allocation2], 4
      %s16 = int_to_ptr.vmem [resolvable:$true] %s15
      %21 = dma.hbm_to_vmem [thread:$0]  %s0, 256, %s16, [#allocation3], 128, 128, 8
    $region5: #{tpu_custom_call.1} parent=1 // pred_fallthru
      _
    // Predicated region
    $region6: #{tpu_custom_call.1} parent=1 // pred_check
      _
    $region7: #{tpu_custom_call.1} parent=1 // pred_check_branch
      %23 = sbr.rel (0) target = $region9
    $region8: #{tpu_custom_call.1} parent=1 // pred_region
      %s25 = ssub.s32 1024, 1024
      %26 = vsyncadd [#allocation6], %s25
      %s27 = sshll.u32 [#allocation5], 4
      %s28 = int_to_ptr.vmem [resolvable:$true] %s27
      %33 = dma.hbm_to_vmem [thread:$0]  %s1, 1024, %s28, [#allocation6], 256, 256, 16
    $region9: #{tpu_custom_call.1} parent=1 // pred_fallthru
      _
    // Predicated region
    $region10: #{tpu_custom_call.1} parent=1 // pred_check
      _
    $region11: #{tpu_custom_call.1} parent=1 // pred_check_branch
      %35 = sbr.rel (0) target = $region13
    $region12: #{tpu_custom_call.1} parent=1 // pred_region
      %36 = dma.done [#allocation3], 256
    $region13: #{tpu_custom_call.1} parent=1 // pred_fallthru
      _
    // Predicated region
    $region14: #{tpu_custom_call.1} parent=1 // pred_check
      _
    $region15: #{tpu_custom_call.1} parent=1 // pred_check_branch
      %38 = sbr.rel (0) target = $region17
    $region16: #{tpu_custom_call.1} parent=1 // pred_region
      %39 = dma.done [#allocation6], 1024
    $region17: #{tpu_custom_call.1} parent=1 // pred_fallthru
      _
    %v40 = vld [vmem:[#allocation5] sm:$0xff]
    %v41 = vld [vmem:[#allocation5 + $0x8] sm:$0xff]
    %v42 = vld [vmem:[#allocation5 + $0x10] sm:$0xff]
    %v43 = vld [vmem:[#allocation5 + $0x18] sm:$0xff]
    %v44 = vld [vmem:[#allocation5 + $0x20] sm:$0xff]
    %v45 = vld [vmem:[#allocation5 + $0x28] sm:$0xff]
    %v46 = vld [vmem:[#allocation5 + $0x30] sm:$0xff]
    %v47 = vld [vmem:[#allocation5 + $0x38] sm:$0xff]
    %v48 = vadd.f32 %v40, %v41
    %49 = vadd.xlane.f32.xlu0 %v48
    %v50 = vpop.xlane.xlu0 %49
    %v51 = vadd.f32 %v42, %v43
    %52 = vadd.xlane.f32.xlu0 %v51
    %v53 = vpop.xlane.xlu0 %52
    %v54 = vadd.f32 %v44, %v45
    %55 = vadd.xlane.f32.xlu0 %v54
    %v56 = vpop.xlane.xlu0 %55
    %v57 = vadd.f32 %v46, %v47
    %58 = vadd.xlane.f32.xlu0 %v57
    %v59 = vpop.xlane.xlu0 %58
    %v60 = vrcp.pop 256.0
    %v61 = vmul.f32 %v50, %v60
    %v62 = vmul.f32 %v53, %v60
    %v63 = vmul.f32 %v56, %v60
    %v64 = vmul.f32 %v59, %v60
    %v65 = vld [vmem:[#allocation2] sm:$0xff]
    %v66 = vld [vmem:[#allocation2 + $0x8] sm:$0xff]
    %v71 = vlaneseq
    %v72 = vand.u32 %v71, 127
    %v73 = vlaneseq
    %v74 = vshrl.u32 %v73, 7
    %v75 = vsub.s32 %v72, %v74
    %v76 = vrot.slane %v61, %v75
    %v77 = vadd.s32 %v72, 4294967288
    %v78 = vlaneseq
    %v79 = vshrl.u32 %v78, 7
    %v80 = vsub.s32 %v77, %v79
    %v81 = vrot.slane %v62, %v80
    %vm82 = vcmask 130112
    %v83 = vsel %vm82, %v81, %v76
    %v84 = vlaneseq
    %v85 = vshrl.u32 %v84, 7
    %v86 = vsub.s32 %v72, %v85
    %v87 = vrot.slane %v63, %v86
    %v88 = vlaneseq
    %v89 = vshrl.u32 %v88, 7
    %v90 = vsub.s32 %v77, %v89
    %v91 = vrot.slane %v64, %v90
    %v92 = vsel %vm82, %v91, %v87
    %vm93 = vcmask 1041409
    %v94 = vsel %vm93, %v92, %v83
    %vm95 = vcmask 130048
    %v96 = vsel %vm95, %v94, 0
    %98 = vmatprep.subr.mxu0 0.0
    %99 = vmatpush1.msra.mxu0 %v65
    %100 = vmatprep.subr.mxu0 0.0
    %101 = vmatpush1.msra.mxu0 %v66
    %102 = vmatprep.subr.mxu0 0.0
    %103 = vmatpush1.msra.mxu0 0.0
    %104 = vmatprep.subr.mxu0 0.0
    %105 = vmatpush1.msra.mxu0 0.0
    %106 = vmatprep.subr.mxu0 0.0
    %107 = vmatpush1.msra.mxu0 0.0
    %108 = vmatprep.subr.mxu0 0.0
    %109 = vmatpush1.msra.mxu0 0.0
    %110 = vmatprep.subr.mxu0 0.0
    %111 = vmatpush1.msra.mxu0 0.0
    %112 = vmatprep.subr.mxu0 0.0
    %113 = vmatpush1.msra.mxu0 0.0
    %114 = vmatprep.subr.mxu0 0.0
    %115 = vmatpush1.msra.mxu0 0.0
    %116 = vmatprep.subr.mxu0 0.0
    %117 = vmatpush1.msra.mxu0 0.0
    %118 = vmatprep.subr.mxu0 0.0
    %119 = vmatpush1.msra.mxu0 0.0
    %120 = vmatprep.subr.mxu0 0.0
    %121 = vmatpush1.msra.mxu0 0.0
    %122 = vmatprep.subr.mxu0 0.0
    %123 = vmatpush1.msra.mxu0 0.0
    %124 = vmatprep.subr.mxu0 0.0
    %125 = vmatpush1.msra.mxu0 0.0
    %126 = vmatprep.subr.mxu0 0.0
    %127 = vmatpush1.msra.mxu0 0.0
    %128 = vmatprep.subr.mxu0 0.0
    %129 = vmatpush1.msra.mxu0 0.0
    %130 = vmatprep.subr.mxu0 0.0
    %131 = vmatpush1.msra.mxu0 0.0
    %132 = vmatprep.subr.mxu0 0.0
    %133 = vmatpush1.msra.mxu0 0.0
    %134 = vmatprep.subr.mxu0 0.0
    %135 = vmatpush1.msra.mxu0 0.0
    %136 = vmatprep.subr.mxu0 0.0
    %137 = vmatpush1.msra.mxu0 0.0
    %138 = vmatprep.subr.mxu0 0.0
    %139 = vmatpush1.msra.mxu0 0.0
    %140 = vmatprep.subr.mxu0 0.0
    %141 = vmatpush1.msra.mxu0 0.0
    %142 = vmatprep.subr.mxu0 0.0
    %143 = vmatpush1.msra.mxu0 0.0
    %144 = vmatprep.subr.mxu0 0.0
    %145 = vmatpush1.msra.mxu0 0.0
    %146 = vmatprep.subr.mxu0 0.0
    %147 = vmatpush1.msra.mxu0 0.0
    %148 = vmatprep.subr.mxu0 0.0
    %149 = vmatpush1.msra.mxu0 0.0
    %150 = vmatprep.subr.mxu0 0.0
    %151 = vmatpush1.msra.mxu0 0.0
    %152 = vmatprep.subr.mxu0 0.0
    %153 = vmatpush1.msra.mxu0 0.0
    %154 = vmatprep.subr.mxu0 0.0
    %155 = vmatpush1.msra.mxu0 0.0
    %156 = vmatprep.subr.mxu0 0.0
    %157 = vmatpush1.msra.mxu0 0.0
    %158 = vmatprep.subr.mxu0 0.0
    %159 = vmatpush1.msra.mxu0 0.0
    %160 = vmatprep.subr.mxu0 0.0
    %161 = vmatpush1.msra.mxu0 0.0
    %162 = vmatprep.mubr.f32.mxu0 0.0
    %163 = vmatmul.mubr.f32.gmra.mrb[0].mxu0 %v96
    %v164 = vpop.f32.mrb[0].mxu0
    %v165 = vadd.f32 0.0, %v164
    %v166 = vpop.f32.mrb[0].mxu0
    %167 = vdwg.mxu0
    %v168 = vxor.u32 %v165, 2147483648
    %v169 = vmul.f32 %v168, 1.442695
    %v170 = vpow.pop %v169
    %v171 = vadd.f32 %v170, 1.0
    %v172 = vrcp.pop %v171
    %v173 = vmul.f32 1.0, %v172
    %v174 = vlaneseq
    %v175 = vshrl.u32 %v174, 7
    %v176 = vsub.s32 0, %v175
    %v177 = vrot.slane %v173, %v176
    %179 = vbcast.lane.b32.xlu0 %v177, 256
    %v180 = vpop.permute.xlu0 %179
    %s182 = sor.u32 256, 8
    %183 = vbcast.lane.b32.xlu0 %v177, %s182
    %v184 = vpop.permute.xlu0 %183
    %v185 = vlaneseq
    %v186 = vshrl.u32 %v185, 7
    %v187 = vsub.s32 1, %v186
    %v188 = vrot.slane %v173, %v187
    %190 = vbcast.lane.b32.xlu0 %v188, 256
    %v191 = vpop.permute.xlu0 %190
    %s193 = sor.u32 256, 8
    %194 = vbcast.lane.b32.xlu0 %v188, %s193
    %v195 = vpop.permute.xlu0 %194
    %v196 = vmul.f32 %v40, %v180
    %v197 = vmul.f32 %v41, %v180
    %v198 = vmul.f32 %v42, %v184
    %v199 = vmul.f32 %v43, %v184
    %v200 = vmul.f32 %v44, %v191
    %v201 = vmul.f32 %v45, %v191
    %v202 = vmul.f32 %v46, %v195
    %v203 = vmul.f32 %v47, %v195
    %204 = vst [vmem:[#allocation7] sm:$0xff] %v196
    %205 = vst [vmem:[#allocation7 + $0x8] sm:$0xff] %v197
    %206 = vst [vmem:[#allocation7 + $0x10] sm:$0xff] %v198
    %207 = vst [vmem:[#allocation7 + $0x18] sm:$0xff] %v199
    %208 = vst [vmem:[#allocation7 + $0x20] sm:$0xff] %v200
    %209 = vst [vmem:[#allocation7 + $0x28] sm:$0xff] %v201
    %210 = vst [vmem:[#allocation7 + $0x30] sm:$0xff] %v202
    %211 = vst [vmem:[#allocation7 + $0x38] sm:$0xff] %v203
    // Predicated region
    $region18: #{tpu_custom_call.1} parent=1 // pred_check
      _
    $region19: #{tpu_custom_call.1} parent=1 // pred_check_branch
      %213 = sbr.rel (0) target = $region21
    $region20: #{tpu_custom_call.1} parent=1 // pred_region
      %s215 = ssub.s32 1024, 1024
      %216 = vsyncadd [#allocation4], %s215
      %s217 = sshll.u32 [#allocation7], 4
      %s218 = int_to_ptr.vmem [resolvable:$true] %s217
      %223 = dma.vmem_to_hbm [thread:$0]  %s218, 1024, %s2, [#allocation4], 256, 256, 16
    $region21: #{tpu_custom_call.1} parent=1 // pred_fallthru
      _
    // Predicated region
    $region22: #{tpu_custom_call.1} parent=1 // pred_check
      _
    $region23: #{tpu_custom_call.1} parent=1 // pred_check_branch
      %225 = sbr.rel (0) target = $region25
    $region24: #{tpu_custom_call.1} parent=1 // pred_region
      %226 = dma.done [#allocation4], 1024
    $region25: #{tpu_custom_call.1} parent=1 // pred_fallthru
      _
    %227 = vsyncpa [#allocation3], 1
    %228 = vsyncpa [#allocation6], 1
    %229 = vsyncpa [#allocation4], 1

</llo_original>
